<compile_context>
chip_gen: v5e
topology: v5e:2x2
jax: 0.10.0
libtpu: 0.0.40
codegen_flags: <defaults>
</compile_context>

<pallas_src>
import functools

import jax
import jax.numpy as jnp
from jax import lax
from jax.experimental import pallas as pl
from jax.experimental.pallas import tpu as pltpu


def _make_loc_loss_kernel(c_valid: int, tc: int, inv_c: float):
    """Builds the kernel with compile-time constants baked in."""

    def kernel(pred_ref, gt_ref, out_ref, acc_ref):
        i = pl.program_id(0)

        @pl.when(i == 0)
        def _():
            acc_ref[...] = jnp.zeros_like(acc_ref)

        # (TC, N) tile; cast to f32 inside the kernel so narrow input dtypes
        # (bf16 pred, int/bool-like gt) keep the HBM->VMEM traffic small.
        p = jax.nn.sigmoid(pred_ref[...].astype(jnp.float32))
        g = gt_ref[...].astype(jnp.float32)

        # Exact-equality counts, faithful to the PyTorch reference.
        one_num = jnp.sum((g == 1.0).astype(jnp.float32), axis=-1, keepdims=True)
        zero_num = jnp.sum((g == 0.0).astype(jnp.float32), axis=-1, keepdims=True)

        # Algebraic simplification: sum((1-g)*p) == sum(p) - sum(g*p).
        s_p = jnp.sum(p, axis=-1, keepdims=True)          # (TC, 1)
        s_gp = jnp.sum(g * p, axis=-1, keepdims=True)      # (TC, 1)

        zero = (s_p - s_gp) / zero_num
        one = s_gp / one_num
        contrib = zero - one                                # (TC, 1) per-channel

        # Mask out channels that only exist because of padding to TC.
        ch = i * tc + lax.broadcasted_iota(jnp.int32, (tc, 1), 0)
        contrib = jnp.where(ch < c_valid, contrib, 0.0)

        acc_ref[...] += jnp.sum(contrib, keepdims=True)

        @pl.when(i == pl.num_programs(0) - 1)
        def _():
            # Divide-by-C folded into a compile-time constant multiply.
            out_ref[...] = acc_ref[...] * inv_c

    return kernel


@functools.partial(jax.jit, static_argnames=("tc",))
def loc_loss(pred: jax.Array, gt: jax.Array, *, tc: int = 8) -> jax.Array:
    """pred, gt: (C, H, W). Returns scalar f32 loss."""
    C, H, W = pred.shape
    N = H * W

    # Lane-dense flatten: (C, H, W) -> (C, H*W); last dim maps to lanes.
    pred2 = pred.reshape(C, N)
    gt2 = gt.reshape(C, N)

    # Pad the channel axis so blocks of TC channels tile it exactly.
    c_pad = pl.cdiv(C, tc) * tc
    if c_pad != C:
        pred2 = jnp.pad(pred2, ((0, c_pad - C), (0, 0)))
        gt2 = jnp.pad(gt2, ((0, c_pad - C), (0, 0)))

    kernel = _make_loc_loss_kernel(C, tc, float(1.0 / C))

    out = pl.pallas_call(
        kernel,
        out_shape=jax.ShapeDtypeStruct((1, 1), jnp.float32),
        grid_spec=pltpu.PrefetchScalarGridSpec(
            num_scalar_prefetch=0,
            grid=(c_pad // tc,),
            in_specs=[
                pl.BlockSpec((tc, N), lambda i: (i, 0)),
                pl.BlockSpec((tc, N), lambda i: (i, 0)),
            ],
            out_specs=pl.BlockSpec((1, 1), lambda i: (0, 0)),
            scratch_shapes=[pltpu.VMEM((1, 1), jnp.float32)],
        ),
        compiler_params=pltpu.CompilerParams(
            dimension_semantics=("arbitrary",),  # sequential accumulation axis
        ),
    )(pred2, gt2)
    return out[0, 0]


def loc_loss_ref(pred, gt):
    p = jax.nn.sigmoid(pred.astype(jnp.float32))
    g = gt.astype(jnp.float32)
    loss = 0.0
    for i in range(pred.shape[0]):
        t1 = p[i].reshape(-1)
        t2 = g[i].reshape(-1)
        one_num = jnp.sum(t2 == 1.0)
        zero_num = jnp.sum(t2 == 0.0)
        zero = jnp.sum(-(t2 - 1.0) * t1) / zero_num
        one = jnp.sum(t1 * t2) / one_num
        loss = loss + (zero - one)
    return loss / pred.shape[0]


if __name__ == "__main__":
    key = jax.random.PRNGKey(0)
    k_pred, k_gt = jax.random.split(key)

    C, H, W = 4, 16, 16
    pred = jax.random.normal(k_pred, (C, H, W), dtype=jnp.float32)
    # Binary ground-truth mask (values in {0, 1}); both classes present w.h.p.
    gt = (jax.random.uniform(k_gt, (C, H, W)) > 0.5).astype(jnp.float32)

    out = loc_loss(pred, gt)
    out = jax.block_until_ready(out)

    ref = loc_loss_ref(pred, gt)
    assert jnp.allclose(out, ref, atol=1e-5, rtol=1e-5), (out, ref)

    print("KERNEL_OK")
</pallas_src>

<mosaic_0001>
module attributes {stable_mosaic.version = 11 : i64} {
  func.func @kernel(%arg0: i32, %arg1: memref<8x256xf32, #tpu.memory_space<vmem>>, %arg2: memref<8x256xf32, #tpu.memory_space<vmem>>, %arg3: memref<1x1xf32, #tpu.memory_space<vmem>>, %arg4: memref<1x1xf32, #tpu.memory_space<vmem>>) attributes {dimension_semantics = [#tpu.dimension_semantics<arbitrary>], iteration_bounds = array<i64: 1>, scalar_prefetch = 0 : i64, scratch_operands = 1 : i64, tpu.core_type = #tpu.core_type<tc>, window_params = [{transform_indices = @transform_0, window_bounds = array<i64: 8, 256>}, {transform_indices = @transform_1, window_bounds = array<i64: 8, 256>}, {pipeline_mode = #tpu.pipeline_mode<synchronous>, transform_indices = @transform_2, window_bounds = array<i64: 1, 1>}]} {
    %c0_i32 = arith.constant 0 : i32
    %0 = arith.cmpi eq, %arg0, %c0_i32 : i32
    %1 = arith.extui %0 : i1 to i32
    %c0_i32_0 = arith.constant 0 : i32
    %2 = arith.cmpi ne, %1, %c0_i32_0 : i32
    scf.if %2 {
      %cst_18 = arith.constant 0.000000e+00 : f32
      %50 = vector.broadcast %cst_18 : f32 to vector<1x1xf32>
      %c0_19 = arith.constant 0 : index
      %c0_20 = arith.constant 0 : index
      %51 = vector.load %arg4[%c0_19, %c0_20] : memref<1x1xf32, #tpu.memory_space<vmem>>, vector<1x1xf32>
      tpu.vector_store %arg4[%c0_19, %c0_20], %50 {strides = array<i32>} : memref<1x1xf32, #tpu.memory_space<vmem>>, vector<1x1xf32>,
    } else {
    }
    %c0 = arith.constant 0 : index
    %c0_1 = arith.constant 0 : index
    %3 = vector.load %arg1[%c0, %c0_1] : memref<8x256xf32, #tpu.memory_space<vmem>>, vector<8x256xf32>
    %4 = arith.negf %3 : vector<8x256xf32>
    %5 = math.exp %4 : vector<8x256xf32>
    %cst = arith.constant 1.000000e+00 : f32
    %6 = vector.broadcast %cst : f32 to vector<8x256xf32>
    %7 = arith.addf %6, %5 : vector<8x256xf32>
    %8 = arith.divf %6, %7 : vector<8x256xf32>
    %c0_2 = arith.constant 0 : index
    %c0_3 = arith.constant 0 : index
    %9 = vector.load %arg2[%c0_2, %c0_3] : memref<8x256xf32, #tpu.memory_space<vmem>>, vector<8x256xf32>
    %cst_4 = arith.constant 1.000000e+00 : f32
    %10 = vector.broadcast %cst_4 : f32 to vector<8x256xf32>
    %11 = arith.cmpf oeq, %9, %10 : vector<8x256xf32>
    %12 = arith.extui %11 : vector<8x256xi1> to vector<8x256xi32>
    %13 = arith.sitofp %12 : vector<8x256xi32> to vector<8x256xf32>
    %cst_5 = arith.constant dense<0.000000e+00> : vector<8xf32>
    %14 = vector.multi_reduction <add>, %13, %cst_5 [1] : vector<8x256xf32> to vector<8xf32>
    %15 = vector.shape_cast %14 : vector<8xf32> to vector<8x1xf32>
    %cst_6 = arith.constant 0.000000e+00 : f32
    %16 = vector.broadcast %cst_6 : f32 to vector<8x256xf32>
    %17 = arith.cmpf oeq, %9, %16 : vector<8x256xf32>
    %18 = arith.extui %17 : vector<8x256xi1> to vector<8x256xi32>
    %19 = arith.sitofp %18 : vector<8x256xi32> to vector<8x256xf32>
    %cst_7 = arith.constant dense<0.000000e+00> : vector<8xf32>
    %20 = vector.multi_reduction <add>, %19, %cst_7 [1] : vector<8x256xf32> to vector<8xf32>
    %21 = vector.shape_cast %20 : vector<8xf32> to vector<8x1xf32>
    %cst_8 = arith.constant dense<0.000000e+00> : vector<8xf32>
    %22 = vector.multi_reduction <add>, %8, %cst_8 [1] : vector<8x256xf32> to vector<8xf32>
    %23 = vector.shape_cast %22 : vector<8xf32> to vector<8x1xf32>
    %24 = arith.mulf %9, %8 : vector<8x256xf32>
    %cst_9 = arith.constant dense<0.000000e+00> : vector<8xf32>
    %25 = vector.multi_reduction <add>, %24, %cst_9 [1] : vector<8x256xf32> to vector<8xf32>
    %26 = vector.shape_cast %25 : vector<8xf32> to vector<8x1xf32>
    %27 = arith.subf %23, %26 : vector<8x1xf32>
    %28 = arith.divf %27, %21 : vector<8x1xf32>
    %29 = arith.divf %26, %15 : vector<8x1xf32>
    %30 = arith.subf %28, %29 : vector<8x1xf32>
    %c8_i32 = arith.constant 8 : i32
    %31 = arith.muli %arg0, %c8_i32 : i32
    %32 = tpu.iota {dimensions = array<i32: 0>} : vector<8x1xi32>
    %33 = vector.broadcast %31 : i32 to vector<8x1xi32>
    %34 = arith.addi %33, %32 : vector<8x1xi32>
    %c4_i32 = arith.constant 4 : i32
    %35 = vector.broadcast %c4_i32 : i32 to vector<8x1xi32>
    %36 = arith.cmpi slt, %34, %35 : vector<8x1xi32>
    %cst_10 = arith.constant 0.000000e+00 : f32
    %37 = vector.broadcast %cst_10 : f32 to vector<8x1xf32>
    %38 = arith.select %36, %30, %37 : vector<8x1xi1>, vector<8x1xf32>
    %c0_11 = arith.constant 0 : index
    %c0_12 = arith.constant 0 : index
    %39 = vector.load %arg4[%c0_11, %c0_12] : memref<1x1xf32, #tpu.memory_space<vmem>>, vector<1x1xf32>
    %40 = vector.shape_cast %38 : vector<8x1xf32> to vector<1x8x1xf32>
    %cst_13 = arith.constant dense<0.000000e+00> : vector<1xf32>
    %41 = vector.multi_reduction <add>, %40, %cst_13 [1, 2] : vector<1x8x1xf32> to vector<1xf32>
    %42 = vector.shape_cast %41 : vector<1xf32> to vector<1x1x1xf32>
    %43 = vector.extract %42[0, 0, 0] : f32 from vector<1x1x1xf32>
    %44 = vector.broadcast %43 : f32 to vector<1x1xf32>
    %45 = arith.addf %39, %44 : vector<1x1xf32>
    %c0_14 = arith.constant 0 : index
    %c0_15 = arith.constant 0 : index
    %46 = vector.load %arg4[%c0_14, %c0_15] : memref<1x1xf32, #tpu.memory_space<vmem>>, vector<1x1xf32>
    tpu.vector_store %arg4[%c0_14, %c0_15], %45 {strides = array<i32>} : memref<1x1xf32, #tpu.memory_space<vmem>>, vector<1x1xf32>,
    %c0_i32_16 = arith.constant 0 : i32
    %47 = arith.cmpi eq, %arg0, %c0_i32_16 : i32
    %48 = arith.extui %47 : i1 to i32
    %c0_i32_17 = arith.constant 0 : i32
    %49 = arith.cmpi ne, %48, %c0_i32_17 : i32
    scf.if %49 {
      %c0_18 = arith.constant 0 : index
      %c0_19 = arith.constant 0 : index
      %50 = vector.load %arg4[%c0_18, %c0_19] : memref<1x1xf32, #tpu.memory_space<vmem>>, vector<1x1xf32>
      %cst_20 = arith.constant 2.500000e-01 : f32
      %51 = vector.broadcast %cst_20 : f32 to vector<1x1xf32>
      %52 = arith.mulf %50, %51 : vector<1x1xf32>
      %c0_21 = arith.constant 0 : index
      %c0_22 = arith.constant 0 : index
      %53 = vector.load %arg3[%c0_21, %c0_22] : memref<1x1xf32, #tpu.memory_space<vmem>>, vector<1x1xf32>
      tpu.vector_store %arg3[%c0_21, %c0_22], %52 {strides = array<i32>} : memref<1x1xf32, #tpu.memory_space<vmem>>, vector<1x1xf32>,
    } else {
    }
    return
  }
  func.func @transform_0(%arg0: i32) -> (i32, i32) {
    %c0_i32 = arith.constant 0 : i32
    %c0_i32_0 = arith.constant 0 : i32
    return %arg0, %c0_i32 : i32, i32
  }
  func.func @transform_1(%arg0: i32) -> (i32, i32) {
    %c0_i32 = arith.constant 0 : i32
    %c0_i32_0 = arith.constant 0 : i32
    return %arg0, %c0_i32 : i32, i32
  }
  func.func @transform_2(%arg0: i32) -> (i32, i32) {
    %c0_i32 = arith.constant 0 : i32
    %c0_i32_0 = arith.constant 0 : i32
    %c0_i32_1 = arith.constant 0 : i32
    return %c0_i32, %c0_i32_0 : i32, i32
  }
}

</mosaic_0001>

<llo_original>
// kernel: loc_loss.1
$region0: #{loc_loss.1}
  #allocation0 [shape = 'u32[]', space=smem, size = 0x4, offset = 0x4, fixed_abs, tag = 'smem constant byte address 0x4 - core index']
  #allocation1 [shape = 'u32[72,128]{1,0:T(1,128)}', space=vmem, size = 0x9000, scoped, tag = 'internal scratch']
  #allocation2 [shape = 'f32[1,1]{1,0:T(1,128)}', space=vmem, size = 0x200, scoped, tag = 'scratch operand']
  %s0 = inlined_call_operand.vmem [shape: f32[8,256], index: 0, kind: input, shape index: {}]
  %s1 = inlined_call_operand.vmem [shape: f32[8,256], index: 1, kind: input, shape index: {}]
  %s2 = inlined_call_operand.hbm [shape: f32[1,1], index: 2, kind: output, shape index: {}]
  %s3 = sld [smem:[#allocation0]]
  $region26: #{loc_loss.1} parent=0
    _
  %s5 = ssub.s32 1, %s3
  %s6 = scalar_select 0, %s5, %s3
  $region1: #{loc_loss.1} parent=0
    #allocation3 [shape = 'u8[512]{0}', space=vmem, size = 0x400, scoped, tag = 'output window, operand 0, single buffered']
    #allocation4 [shape = 's32[1]{0}', space=sflag, size = 0x4, scoped, tag = 'scoped memory for loc_loss.1']
    %7 = vsyncpa [#allocation4], 0
    // Predicated region
    $region2: #{loc_loss.1} parent=1 // pred_check
      _
    $region3: #{loc_loss.1} parent=1 // pred_check_branch
      %9 = sbr.rel (0) target = $region5
    $region4: #{loc_loss.1} parent=1 // pred_region
      _
    $region5: #{loc_loss.1} parent=1 // pred_fallthru
      _
    // Predicated region
    $region6: #{loc_loss.1} parent=1 // pred_check
      _
    $region7: #{loc_loss.1} parent=1 // pred_check_branch
      %11 = sbr.rel (0) target = $region9
    $region8: #{loc_loss.1} parent=1 // pred_region
      _
    $region9: #{loc_loss.1} parent=1 // pred_fallthru
      _
    %p12 = scmp.eq.s32.totalorder 0, 0
    // Predicated region
    $region10: #{loc_loss.1} parent=1 // pred_check
      %p13 = pneg %p12
    $region11: #{loc_loss.1} parent=1 // pred_check_branch
      %15 = sbr.rel (%p13) target = $region13
    $region12: #{loc_loss.1} parent=1 // pred_region
      %vm16 = vcmask 0
      %17 = vst.msk [vmem:[#allocation2] sm:$0x1] %vm16, 0.0
    $region13: #{loc_loss.1} parent=1 // pred_fallthru
      _
    %v18 = vld [vmem:[%s0] sm:$0xff]
    %v19 = vld [vmem:[%s0 + $0x8] sm:$0xff]
    %v20 = vxor.u32 %v18, 2147483648
    %v21 = vxor.u32 %v19, 2147483648
    %v22 = vmul.f32 %v20, 1.442695
    %v23 = vpow.pop %v22
    %v24 = vmul.f32 %v21, 1.442695
    %v25 = vpow.pop %v24
    %v26 = vadd.f32 %v23, 1.0
    %v27 = vadd.f32 %v25, 1.0
    %v28 = vrcp.pop %v26
    %v29 = vmul.f32 %v26, %v28
    %v30 = vsub.f32 1.0, %v29
    %v31 = vmul.f32 %v28, %v30
    %v32 = vadd.f32 %v28, %v31
    %vm33 = vweird.f32 %v26
    %vm34 = vweird.f32 %v28
    %vm35 = vmor %vm33, %vm34
    %v36 = vsel %vm35, %v28, %v32
    %v37 = vand.u32 2147483647, %v26
    %vm38 = vcmp.eq.f32.partialorder %v37, 8.507059e+37
    %v39 = vand.u32 %v26, 2147483648
    %v40 = vor.u32 1.1754944e-38, %v39
    %v41 = vsel %vm38, %v40, %v36
    %v42 = vmul.f32 1.0, %v41
    %v43 = vrcp.pop %v27
    %v44 = vmul.f32 %v27, %v43
    %v45 = vsub.f32 1.0, %v44
    %v46 = vmul.f32 %v43, %v45
    %v47 = vadd.f32 %v43, %v46
    %vm48 = vweird.f32 %v27
    %vm49 = vweird.f32 %v43
    %vm50 = vmor %vm48, %vm49
    %v51 = vsel %vm50, %v43, %v47
    %v52 = vand.u32 2147483647, %v27
    %vm53 = vcmp.eq.f32.partialorder %v52, 8.507059e+37
    %v54 = vand.u32 %v27, 2147483648
    %v55 = vor.u32 1.1754944e-38, %v54
    %v56 = vsel %vm53, %v55, %v51
    %v57 = vmul.f32 1.0, %v56
    %v58 = vld [vmem:[%s1] sm:$0xff]
    %v59 = vld [vmem:[%s1 + $0x8] sm:$0xff]
    %vm60 = vcmp.eq.f32.partialorder %v58, 1.0
    %vm61 = vcmp.eq.f32.partialorder %v59, 1.0
    %v62 = vsel %vm60, 1, 0
    %v63 = vsel %vm61, 1, 0
    %v64 = vcvt.s32.f32 %v62
    %v65 = vcvt.s32.f32 %v63
    %v66 = vadd.f32 %v64, %v65
    %67 = vadd.xlane.f32.xlu0 %v66
    %v68 = vpop.xlane.xlu0 %67
    %vm69 = vcmp.eq.f32.partialorder %v58, 0.0
    %vm70 = vcmp.eq.f32.partialorder %v59, 0.0
    %v71 = vsel %vm69, 1, 0
    %v72 = vsel %vm70, 1, 0
    %v73 = vcvt.s32.f32 %v71
    %v74 = vcvt.s32.f32 %v72
    %v75 = vadd.f32 %v73, %v74
    %76 = vadd.xlane.f32.xlu0 %v75
    %v77 = vpop.xlane.xlu0 %76
    %v78 = vadd.f32 %v42, %v57
    %79 = vadd.xlane.f32.xlu0 %v78
    %v80 = vpop.xlane.xlu0 %79
    %v81 = vmul.f32 %v58, %v42
    %v82 = vmul.f32 %v59, %v57
    %v83 = vadd.f32 %v81, %v82
    %84 = vadd.xlane.f32.xlu0 %v83
    %v85 = vpop.xlane.xlu0 %84
    %v86 = vsub.f32 %v80, %v85
    %v87 = vrcp.pop %v77
    %v88 = vmul.f32 %v77, %v87
    %v89 = vsub.f32 1.0, %v88
    %v90 = vmul.f32 %v87, %v89
    %v91 = vadd.f32 %v87, %v90
    %vm92 = vweird.f32 %v77
    %vm93 = vweird.f32 %v87
    %vm94 = vmor %vm92, %vm93
    %v95 = vsel %vm94, %v87, %v91
    %v96 = vand.u32 2147483647, %v77
    %vm97 = vcmp.eq.f32.partialorder %v96, 8.507059e+37
    %v98 = vand.u32 %v77, 2147483648
    %v99 = vor.u32 1.1754944e-38, %v98
    %v100 = vsel %vm97, %v99, %v95
    %v101 = vmul.f32 %v86, %v100
    %v102 = vrcp.pop %v68
    %v103 = vmul.f32 %v68, %v102
    %v104 = vsub.f32 1.0, %v103
    %v105 = vmul.f32 %v102, %v104
    %v106 = vadd.f32 %v102, %v105
    %vm107 = vweird.f32 %v68
    %vm108 = vweird.f32 %v102
    %vm109 = vmor %vm107, %vm108
    %v110 = vsel %vm109, %v102, %v106
    %v111 = vand.u32 2147483647, %v68
    %vm112 = vcmp.eq.f32.partialorder %v111, 8.507059e+37
    %v113 = vand.u32 %v68, 2147483648
    %v114 = vor.u32 1.1754944e-38, %v113
    %v115 = vsel %vm112, %v114, %v110
    %v116 = vmul.f32 %v85, %v115
    %v117 = vsub.f32 %v101, %v116
    %s118 = smul.u32 0, 8
    %v119 = vlaneseq
    %v120 = vshrl.u32 %v119, 7
    %v121 = vstv %s118
    %v122 = vadd.s32 %v121, %v120
    %vm123 = vcmp.lt.s32.totalorder %v122, 4
    %v124 = vsel %vm123, %v117, 0.0
    %v125 = vld [vmem:[#allocation2] sm:$0x1]
    %vm126 = vcmask 7168
    %v127 = vsel %vm126, %v124, 0.0
    %128 = vadd.xlane.f32.xlu0 %v127
    %v129 = vpop.xlane.xlu0 %128
    %v130 = vrot.slane %v129, 4
    %v131 = vadd.f32 %v129, %v130
    %v132 = vrot.slane %v131, 2
    %v133 = vadd.f32 %v131, %v132
    %v134 = vrot.slane %v133, 1
    %v135 = vadd.f32 %v133, %v134
    %s136 = vtos %v135
    %v137 = vstv %s136
    %v138 = vadd.f32 %v125, %v137
    %vm139 = vcmask 0
    %140 = vst.msk [vmem:[#allocation2] sm:$0x1] %vm139, %v138
    // Predicated region
    $region14: #{loc_loss.1} parent=1 // pred_check
      %p141 = pneg %p12
    $region15: #{loc_loss.1} parent=1 // pred_check_branch
      %143 = sbr.rel (%p141) target = $region17
    $region16: #{loc_loss.1} parent=1 // pred_region
      %v144 = vld [vmem:[#allocation2] sm:$0x1]
      %v145 = vmul.f32 %v144, 0.25
      %146 = vst.msk [vmem:[#allocation3] sm:$0x1] %vm139, %v145
    $region17: #{loc_loss.1} parent=1 // pred_fallthru
      _
    // Predicated region
    $region18: #{loc_loss.1} parent=1 // pred_check
      _
    $region19: #{loc_loss.1} parent=1 // pred_check_branch
      %148 = sbr.rel (0) target = $region21
    $region20: #{loc_loss.1} parent=1 // pred_region
      %150 = vsyncadd [#allocation4], 0
      %s152 = sshll.u32 [#allocation3], 4
      %s153 = int_to_ptr.vmem [resolvable:$true] %s152
      %s154 = sshll.u32 %s2, 4
      %s155 = int_to_ptr.hbm [resolvable:$true] %s154
      %157 = dma.vmem_to_hbm [thread:$0]  %s153, 16, %s155, [#allocation4]
    $region21: #{loc_loss.1} parent=1 // pred_fallthru
      _
    // Predicated region
    $region22: #{loc_loss.1} parent=1 // pred_check
      _
    $region23: #{loc_loss.1} parent=1 // pred_check_branch
      %159 = sbr.rel (0) target = $region25
    $region24: #{loc_loss.1} parent=1 // pred_region
      %161 = dma.done [#allocation4], 16
    $region25: #{loc_loss.1} parent=1 // pred_fallthru
      _
    %162 = vsyncpa [#allocation4], 1

</llo_original>
